<compile_context>
chip_gen: v7x
topology: tpu7x:2x2x1
jax: 0.10.0
libtpu: 0.0.40
codegen_flags: <defaults>
</compile_context>

<pallas_src>
import math
import jax
import jax.numpy as jnp
from jax.experimental import pallas as pl
from jax.experimental.pallas import tpu as pltpu


def diffusion_embedding_kernel(idx_ref, table_ref, w1_ref, b1_ref,
                               w2_ref, b2_ref, o_ref, x_scratch):
    B = o_ref.shape[0]
    num_steps = table_ref.shape[0]

    # --- gather: table is fully VMEM-resident; B unrolled dynamic-slice loads.
    # Indices are SMEM scalars; B is tiny & static -> unrolled Python loop.
    # Out-of-range steps are clamped (PyTorch indexing would raise instead).
    for i in range(B):
        step = jnp.clip(idx_ref[i], 0, num_steps - 1)
        x_scratch[pl.ds(i, 1), :] = table_ref[pl.ds(step, 1), :]

    # bf16 inputs to the MXU, f32 accumulation (preferred_element_type).
    x = x_scratch[...].astype(jnp.bfloat16)                  # (B, emb_dim)

    # --- projection1 + SiLU (bias add / sigmoid / mul stay in f32) ---
    h = jnp.dot(x, w1_ref[...], preferred_element_type=jnp.float32) + b1_ref[...]
    h = h * jax.nn.sigmoid(h)

    # --- projection2 + SiLU ---
    y = jnp.dot(h.astype(jnp.bfloat16), w2_ref[...],
                preferred_element_type=jnp.float32) + b2_ref[...]
    o_ref[...] = (y * jax.nn.sigmoid(y)).astype(o_ref.dtype)


def diffusion_embedding(diffusion_step, table, w1, b1, w2, b2):
    """diffusion_step: int array (B,). Returns (B, projection_dim) float32."""
    B = diffusion_step.shape[0]
    num_steps, emb_dim = table.shape
    proj_dim = w2.shape[1]
    idx = diffusion_step.astype(jnp.int32)

    # Advisory cost hint: two small matmuls, two SiLUs, tiny total traffic.
    flops = 2 * B * (emb_dim * proj_dim + proj_dim * proj_dim)
    transcendentals = 2 * B * proj_dim                         # two sigmoids
    bytes_accessed = (idx.size * idx.dtype.itemsize
                      + table.size * table.dtype.itemsize
                      + w1.size * w1.dtype.itemsize + b1.size * b1.dtype.itemsize
                      + w2.size * w2.dtype.itemsize + b2.size * b2.dtype.itemsize
                      + B * proj_dim * 4)

    return pl.pallas_call(
        diffusion_embedding_kernel,
        out_shape=jax.ShapeDtypeStruct((B, proj_dim), jnp.float32),
        in_specs=[
            pl.BlockSpec(memory_space=pltpu.MemorySpace.SMEM),   # step indices (scalars)
            pl.BlockSpec(memory_space=pltpu.MemorySpace.VMEM),   # table (25.6 KB, fully resident)
            pl.BlockSpec(memory_space=pltpu.MemorySpace.VMEM),   # w1 (bf16)
            pl.BlockSpec(memory_space=pltpu.MemorySpace.VMEM),   # b1 (f32)
            pl.BlockSpec(memory_space=pltpu.MemorySpace.VMEM),   # w2 (bf16)
            pl.BlockSpec(memory_space=pltpu.MemorySpace.VMEM),   # b2 (f32)
        ],
        out_specs=pl.BlockSpec(memory_space=pltpu.MemorySpace.VMEM),
        scratch_shapes=[
            pltpu.VMEM((B, emb_dim), jnp.float32),               # gathered embedding rows
        ],
        cost_estimate=pl.CostEstimate(flops=flops,
                                      transcendentals=transcendentals,
                                      bytes_accessed=bytes_accessed),
    )(idx, table, w1, b1, w2, b2)


def build_embedding(num_steps, half_dim):
    # mirrors DiffusionEmbedding._build_embedding(num_steps, embedding_dim / 2)
    steps = jnp.arange(num_steps, dtype=jnp.float32)[:, None]
    freqs = (10.0 ** (jnp.arange(half_dim, dtype=jnp.float32)
                      / (half_dim - 1) * 4.0))[None, :]
    tbl = steps * freqs
    return jnp.concatenate([jnp.sin(tbl), jnp.cos(tbl)], axis=1)   # (num_steps, 2*half_dim)


def init_linear(key, in_dim, out_dim):
    # deterministic, PyTorch-Linear-style uniform init (synthetic weights)
    kw, kb = jax.random.split(key)
    bound = 1.0 / math.sqrt(in_dim)
    w = jax.random.uniform(kw, (in_dim, out_dim), jnp.float32, -bound, bound)
    b = jax.random.uniform(kb, (1, out_dim), jnp.float32, -bound, bound)
    return w, b


def reference_forward(diffusion_step, table, w1, b1, w2, b2):
    x = table[diffusion_step]
    h = x @ w1 + b1
    h = h * jax.nn.sigmoid(h)
    y = h @ w2 + b2
    return y * jax.nn.sigmoid(y)


if __name__ == "__main__":
    num_steps = 50
    embedding_dim = 128
    projection_dim = 128
    batch = 8

    key = jax.random.PRNGKey(0)
    k_idx, k1, k2 = jax.random.split(key, 3)

    table = build_embedding(num_steps, embedding_dim // 2)           # (50, 128) f32
    w1_f32, b1 = init_linear(k1, embedding_dim, projection_dim)
    w2_f32, b2 = init_linear(k2, projection_dim, projection_dim)

    # Weights stored in bf16 (halves weight DMA); biases/activations stay f32.
    w1 = w1_f32.astype(jnp.bfloat16)
    w2 = w2_f32.astype(jnp.bfloat16)

    diffusion_step = jax.random.randint(k_idx, (batch,), 0, num_steps, dtype=jnp.int32)

    out = diffusion_embedding(diffusion_step, table, w1, b1, w2, b2)
    out = jax.block_until_ready(out)

    # Reference uses the same (bf16-stored) weights upcast to f32; the kernel
    # additionally rounds dot *inputs* to bf16 for the MXU, hence the tolerance.
    # NOTE: confirm this double-rounding error (~1e-2 abs) is acceptable for the
    # downstream model before shipping.
    ref = reference_forward(diffusion_step, table,
                            w1.astype(jnp.float32), b1,
                            w2.astype(jnp.float32), b2)
    assert out.shape == (batch, projection_dim)
    assert jnp.allclose(out, ref, atol=2e-2, rtol=2e-2), "mismatch vs JAX reference"

    print("KERNEL_OK")
</pallas_src>

<mosaic_0001>
module attributes {stable_mosaic.version = 11 : i64} {
  func.func @diffusion_embedding_kernel(%arg0: memref<8xi32, #tpu.memory_space<smem>>, %arg1: memref<50x128xf32, #tpu.memory_space<vmem>>, %arg2: memref<128x128xbf16, #tpu.memory_space<vmem>>, %arg3: memref<1x128xf32, #tpu.memory_space<vmem>>, %arg4: memref<128x128xbf16, #tpu.memory_space<vmem>>, %arg5: memref<1x128xf32, #tpu.memory_space<vmem>>, %arg6: memref<8x128xf32, #tpu.memory_space<vmem>>, %arg7: memref<8x128xf32, #tpu.memory_space<vmem>>) attributes {dimension_semantics = [], scalar_prefetch = 0 : i64, scratch_operands = 1 : i64, tpu.core_type = #tpu.core_type<tc>} {
    %c0 = arith.constant 0 : index
    %0 = memref.load %arg0[%c0] : memref<8xi32, #tpu.memory_space<smem>>
    %c0_i32 = arith.constant 0 : i32
    %c49_i32 = arith.constant 49 : i32
    %1 = arith.maxsi %c0_i32, %0 : i32
    %2 = arith.minsi %c49_i32, %1 : i32
    %3 = arith.index_cast %2 : i32 to index
    %c0_0 = arith.constant 0 : index
    %4 = vector.load %arg1[%3, %c0_0] : memref<50x128xf32, #tpu.memory_space<vmem>>, vector<1x128xf32>
    %c0_1 = arith.constant 0 : index
    %c0_2 = arith.constant 0 : index
    %5 = vector.load %arg7[%c0_1, %c0_2] : memref<8x128xf32, #tpu.memory_space<vmem>>, vector<1x128xf32>
    tpu.vector_store %arg7[%c0_1, %c0_2], %4 {strides = array<i32>} : memref<8x128xf32, #tpu.memory_space<vmem>>, vector<1x128xf32>,
    %c1 = arith.constant 1 : index
    %6 = memref.load %arg0[%c1] : memref<8xi32, #tpu.memory_space<smem>>
    %c0_i32_3 = arith.constant 0 : i32
    %c49_i32_4 = arith.constant 49 : i32
    %7 = arith.maxsi %c0_i32_3, %6 : i32
    %8 = arith.minsi %c49_i32_4, %7 : i32
    %9 = arith.index_cast %8 : i32 to index
    %c0_5 = arith.constant 0 : index
    %10 = vector.load %arg1[%9, %c0_5] : memref<50x128xf32, #tpu.memory_space<vmem>>, vector<1x128xf32>
    %c1_6 = arith.constant 1 : index
    %c0_7 = arith.constant 0 : index
    %11 = vector.load %arg7[%c1_6, %c0_7] : memref<8x128xf32, #tpu.memory_space<vmem>>, vector<1x128xf32>
    tpu.vector_store %arg7[%c1_6, %c0_7], %10 {strides = array<i32>} : memref<8x128xf32, #tpu.memory_space<vmem>>, vector<1x128xf32>,
    %c2 = arith.constant 2 : index
    %12 = memref.load %arg0[%c2] : memref<8xi32, #tpu.memory_space<smem>>
    %c0_i32_8 = arith.constant 0 : i32
    %c49_i32_9 = arith.constant 49 : i32
    %13 = arith.maxsi %c0_i32_8, %12 : i32
    %14 = arith.minsi %c49_i32_9, %13 : i32
    %15 = arith.index_cast %14 : i32 to index
    %c0_10 = arith.constant 0 : index
    %16 = vector.load %arg1[%15, %c0_10] : memref<50x128xf32, #tpu.memory_space<vmem>>, vector<1x128xf32>
    %c2_11 = arith.constant 2 : index
    %c0_12 = arith.constant 0 : index
    %17 = vector.load %arg7[%c2_11, %c0_12] : memref<8x128xf32, #tpu.memory_space<vmem>>, vector<1x128xf32>
    tpu.vector_store %arg7[%c2_11, %c0_12], %16 {strides = array<i32>} : memref<8x128xf32, #tpu.memory_space<vmem>>, vector<1x128xf32>,
    %c3 = arith.constant 3 : index
    %18 = memref.load %arg0[%c3] : memref<8xi32, #tpu.memory_space<smem>>
    %c0_i32_13 = arith.constant 0 : i32
    %c49_i32_14 = arith.constant 49 : i32
    %19 = arith.maxsi %c0_i32_13, %18 : i32
    %20 = arith.minsi %c49_i32_14, %19 : i32
    %21 = arith.index_cast %20 : i32 to index
    %c0_15 = arith.constant 0 : index
    %22 = vector.load %arg1[%21, %c0_15] : memref<50x128xf32, #tpu.memory_space<vmem>>, vector<1x128xf32>
    %c3_16 = arith.constant 3 : index
    %c0_17 = arith.constant 0 : index
    %23 = vector.load %arg7[%c3_16, %c0_17] : memref<8x128xf32, #tpu.memory_space<vmem>>, vector<1x128xf32>
    tpu.vector_store %arg7[%c3_16, %c0_17], %22 {strides = array<i32>} : memref<8x128xf32, #tpu.memory_space<vmem>>, vector<1x128xf32>,
    %c4 = arith.constant 4 : index
    %24 = memref.load %arg0[%c4] : memref<8xi32, #tpu.memory_space<smem>>
    %c0_i32_18 = arith.constant 0 : i32
    %c49_i32_19 = arith.constant 49 : i32
    %25 = arith.maxsi %c0_i32_18, %24 : i32
    %26 = arith.minsi %c49_i32_19, %25 : i32
    %27 = arith.index_cast %26 : i32 to index
    %c0_20 = arith.constant 0 : index
    %28 = vector.load %arg1[%27, %c0_20] : memref<50x128xf32, #tpu.memory_space<vmem>>, vector<1x128xf32>
    %c4_21 = arith.constant 4 : index
    %c0_22 = arith.constant 0 : index
    %29 = vector.load %arg7[%c4_21, %c0_22] : memref<8x128xf32, #tpu.memory_space<vmem>>, vector<1x128xf32>
    tpu.vector_store %arg7[%c4_21, %c0_22], %28 {strides = array<i32>} : memref<8x128xf32, #tpu.memory_space<vmem>>, vector<1x128xf32>,
    %c5 = arith.constant 5 : index
    %30 = memref.load %arg0[%c5] : memref<8xi32, #tpu.memory_space<smem>>
    %c0_i32_23 = arith.constant 0 : i32
    %c49_i32_24 = arith.constant 49 : i32
    %31 = arith.maxsi %c0_i32_23, %30 : i32
    %32 = arith.minsi %c49_i32_24, %31 : i32
    %33 = arith.index_cast %32 : i32 to index
    %c0_25 = arith.constant 0 : index
    %34 = vector.load %arg1[%33, %c0_25] : memref<50x128xf32, #tpu.memory_space<vmem>>, vector<1x128xf32>
    %c5_26 = arith.constant 5 : index
    %c0_27 = arith.constant 0 : index
    %35 = vector.load %arg7[%c5_26, %c0_27] : memref<8x128xf32, #tpu.memory_space<vmem>>, vector<1x128xf32>
    tpu.vector_store %arg7[%c5_26, %c0_27], %34 {strides = array<i32>} : memref<8x128xf32, #tpu.memory_space<vmem>>, vector<1x128xf32>,
    %c6 = arith.constant 6 : index
    %36 = memref.load %arg0[%c6] : memref<8xi32, #tpu.memory_space<smem>>
    %c0_i32_28 = arith.constant 0 : i32
    %c49_i32_29 = arith.constant 49 : i32
    %37 = arith.maxsi %c0_i32_28, %36 : i32
    %38 = arith.minsi %c49_i32_29, %37 : i32
    %39 = arith.index_cast %38 : i32 to index
    %c0_30 = arith.constant 0 : index
    %40 = vector.load %arg1[%39, %c0_30] : memref<50x128xf32, #tpu.memory_space<vmem>>, vector<1x128xf32>
    %c6_31 = arith.constant 6 : index
    %c0_32 = arith.constant 0 : index
    %41 = vector.load %arg7[%c6_31, %c0_32] : memref<8x128xf32, #tpu.memory_space<vmem>>, vector<1x128xf32>
    tpu.vector_store %arg7[%c6_31, %c0_32], %40 {strides = array<i32>} : memref<8x128xf32, #tpu.memory_space<vmem>>, vector<1x128xf32>,
    %c7 = arith.constant 7 : index
    %42 = memref.load %arg0[%c7] : memref<8xi32, #tpu.memory_space<smem>>
    %c0_i32_33 = arith.constant 0 : i32
    %c49_i32_34 = arith.constant 49 : i32
    %43 = arith.maxsi %c0_i32_33, %42 : i32
    %44 = arith.minsi %c49_i32_34, %43 : i32
    %45 = arith.index_cast %44 : i32 to index
    %c0_35 = arith.constant 0 : index
    %46 = vector.load %arg1[%45, %c0_35] : memref<50x128xf32, #tpu.memory_space<vmem>>, vector<1x128xf32>
    %c7_36 = arith.constant 7 : index
    %c0_37 = arith.constant 0 : index
    %47 = vector.load %arg7[%c7_36, %c0_37] : memref<8x128xf32, #tpu.memory_space<vmem>>, vector<1x128xf32>
    tpu.vector_store %arg7[%c7_36, %c0_37], %46 {strides = array<i32>} : memref<8x128xf32, #tpu.memory_space<vmem>>, vector<1x128xf32>,
    %c0_38 = arith.constant 0 : index
    %c0_39 = arith.constant 0 : index
    %48 = vector.load %arg7[%c0_38, %c0_39] : memref<8x128xf32, #tpu.memory_space<vmem>>, vector<8x128xf32>
    %49 = arith.truncf %48 : vector<8x128xf32> to vector<8x128xbf16>
    %c0_40 = arith.constant 0 : index
    %c0_41 = arith.constant 0 : index
    %50 = vector.load %arg2[%c0_40, %c0_41] : memref<128x128xbf16, #tpu.memory_space<vmem>>, vector<128x128xbf16>
    %cst = arith.constant dense<0.000000e+00> : vector<8x128xf32>
    %51 = tpu.matmul %49, %50, %cst {dimension_numbers = #tpu.dot_dimension_numbers<[1], [0], [0], [1], [0, 0, 1, 1], [], []>} : vector<8x128xbf16>, vector<128x128xbf16>, vector<8x128xf32> -> vector<8x128xf32>
    %c0_42 = arith.constant 0 : index
    %c0_43 = arith.constant 0 : index
    %52 = vector.load %arg3[%c0_42, %c0_43] : memref<1x128xf32, #tpu.memory_space<vmem>>, vector<1x128xf32>
    %53 = vector.broadcast %52 : vector<1x128xf32> to vector<8x128xf32>
    %54 = arith.addf %51, %53 : vector<8x128xf32>
    %55 = arith.negf %54 : vector<8x128xf32>
    %56 = math.exp %55 : vector<8x128xf32>
    %cst_44 = arith.constant 1.000000e+00 : f32
    %57 = vector.broadcast %cst_44 : f32 to vector<8x128xf32>
    %58 = arith.addf %57, %56 : vector<8x128xf32>
    %59 = arith.divf %57, %58 : vector<8x128xf32>
    %60 = arith.mulf %54, %59 : vector<8x128xf32>
    %61 = arith.truncf %60 : vector<8x128xf32> to vector<8x128xbf16>
    %c0_45 = arith.constant 0 : index
    %c0_46 = arith.constant 0 : index
    %62 = vector.load %arg4[%c0_45, %c0_46] : memref<128x128xbf16, #tpu.memory_space<vmem>>, vector<128x128xbf16>
    %cst_47 = arith.constant dense<0.000000e+00> : vector<8x128xf32>
    %63 = tpu.matmul %61, %62, %cst_47 {dimension_numbers = #tpu.dot_dimension_numbers<[1], [0], [0], [1], [0, 0, 1, 1], [], []>} : vector<8x128xbf16>, vector<128x128xbf16>, vector<8x128xf32> -> vector<8x128xf32>
    %c0_48 = arith.constant 0 : index
    %c0_49 = arith.constant 0 : index
    %64 = vector.load %arg5[%c0_48, %c0_49] : memref<1x128xf32, #tpu.memory_space<vmem>>, vector<1x128xf32>
    %65 = vector.broadcast %64 : vector<1x128xf32> to vector<8x128xf32>
    %66 = arith.addf %63, %65 : vector<8x128xf32>
    %67 = arith.negf %66 : vector<8x128xf32>
    %68 = math.exp %67 : vector<8x128xf32>
    %cst_50 = arith.constant 1.000000e+00 : f32
    %69 = vector.broadcast %cst_50 : f32 to vector<8x128xf32>
    %70 = arith.addf %69, %68 : vector<8x128xf32>
    %71 = arith.divf %69, %70 : vector<8x128xf32>
    %72 = arith.mulf %66, %71 : vector<8x128xf32>
    %c0_51 = arith.constant 0 : index
    %c0_52 = arith.constant 0 : index
    %73 = vector.load %arg6[%c0_51, %c0_52] : memref<8x128xf32, #tpu.memory_space<vmem>>, vector<8x128xf32>
    tpu.vector_store %arg6[%c0_51, %c0_52], %72 {strides = array<i32>} : memref<8x128xf32, #tpu.memory_space<vmem>>, vector<8x128xf32>,
    return
  }
}

</mosaic_0001>

<llo_original>
// kernel: tpu_custom_call.1
$region0: #{tpu_custom_call.1}
  #allocation0 [shape = 'u32[]', space=smem, size = 0x4, offset = 0x4, fixed_abs, tag = 'smem constant byte address 0x4 - core index']
  #allocation1 [shape = 'u32[144,128]{1,0:T(1,128)}', space=vmem, size = 0x12000, scoped, tag = 'internal scratch']
  #allocation2 [shape = 'f32[8,128]{1,0:T(8,128)}', space=vmem, size = 0x1000, scoped, tag = 'scratch operand']
  %s0 = inlined_call_operand.hbm [shape: s32[8], index: 0, kind: input, shape index: {}]
  %s1 = inlined_call_operand.hbm [shape: f32[50,128], index: 1, kind: input, shape index: {}]
  %s2 = inlined_call_operand.hbm [shape: bf16[128,128], index: 2, kind: input, shape index: {}]
  %s3 = inlined_call_operand.vmem [shape: f32[1,128], index: 3, kind: input, shape index: {}]
  %s4 = inlined_call_operand.hbm [shape: bf16[128,128], index: 4, kind: input, shape index: {}]
  %s5 = inlined_call_operand.vmem [shape: f32[1,128], index: 5, kind: input, shape index: {}]
  %s6 = inlined_call_operand.hbm [shape: f32[8,128], index: 6, kind: output, shape index: {}]
  %s7 = sld [smem:[#allocation0]]
  $region50: #{tpu_custom_call.1} parent=0
    _
  %s9 = ssub.s32 1, %s7
  %s10 = scalar_select 0, %s9, %s7
  $region1: #{tpu_custom_call.1} parent=0
    #allocation3 [shape = 'u8[512]{0}', space=smem, size = 0x200, scoped, tag = 'input window, operand 0, single buffered']
    #allocation4 [shape = 's32[1]{0}', space=sflag, size = 0x4, scoped, tag = 'scoped memory for tpu_custom_call.1']
    #allocation5 [shape = 's32[1]{0}', space=sflag, size = 0x4, scoped, tag = 'scoped memory for tpu_custom_call.1']
    #allocation6 [shape = 's32[1]{0}', space=sflag, size = 0x4, scoped, tag = 'scoped memory for tpu_custom_call.1']
    #allocation7 [shape = 'u8[28672]{0}', space=vmem, size = 0x7000, scoped, tag = 'input window, operand 1, single buffered']
    #allocation8 [shape = 'u8[32768]{0}', space=vmem, size = 0x8000, scoped, tag = 'input window, operand 2, single buffered']
    #allocation9 [shape = 's32[1]{0}', space=sflag, size = 0x4, scoped, tag = 'scoped memory for tpu_custom_call.1']
    #allocation10 [shape = 'u8[32768]{0}', space=vmem, size = 0x8000, scoped, tag = 'input window, operand 4, single buffered']
    #allocation11 [shape = 'u8[4096]{0}', space=vmem, size = 0x1000, scoped, tag = 'output window, operand 0, single buffered']
    %11 = vsyncpa [#allocation6], 0
    %12 = vsyncpa [#allocation4], 0
    %13 = vsyncpa [#allocation9], 0
    %14 = vsyncpa [#allocation5], 0
    // Predicated region
    $region2: #{tpu_custom_call.1} parent=1 // pred_check
      _
    $region3: #{tpu_custom_call.1} parent=1 // pred_check_branch
      %16 = sbr.rel (0) target = $region5
    $region4: #{tpu_custom_call.1} parent=1 // pred_region
      %s18 = ssub.s32 16, 16
      %19 = vsyncadd [#allocation6], %s18
      %22 = dma.hbm_to_smem %s0, 16, [#allocation3], [#allocation6]
    $region5: #{tpu_custom_call.1} parent=1 // pred_fallthru
      _
    // Predicated region
    $region6: #{tpu_custom_call.1} parent=1 // pred_check
      _
    $region7: #{tpu_custom_call.1} parent=1 // pred_check_branch
      %24 = sbr.rel (0) target = $region9
    $region8: #{tpu_custom_call.1} parent=1 // pred_region
      %s26 = ssub.s32 896, 896
      %27 = vsyncadd [#allocation4], %s26
      %s28 = sshll.u32 [#allocation7], 4
      %s29 = int_to_ptr.vmem [resolvable:$true] %s28
      %34 = dma.hbm_to_vmem [thread:$0]  %s1, 896, %s29, [#allocation4], 128, 128, 8
    $region9: #{tpu_custom_call.1} parent=1 // pred_fallthru
      _
    // Predicated region
    $region10: #{tpu_custom_call.1} parent=1 // pred_check
      _
    $region11: #{tpu_custom_call.1} parent=1 // pred_check_branch
      %36 = sbr.rel (0) target = $region13
    $region12: #{tpu_custom_call.1} parent=1 // pred_region
      %s38 = ssub.s32 1024, 1024
      %39 = vsyncadd [#allocation9], %s38
      %s40 = sshll.u32 [#allocation8], 4
      %s41 = int_to_ptr.vmem [resolvable:$true] %s40
      %46 = dma.hbm_to_vmem [thread:$0]  %s2, 1024, %s41, [#allocation9], 64, 64, 4
    $region13: #{tpu_custom_call.1} parent=1 // pred_fallthru
      _
    // Predicated region
    $region14: #{tpu_custom_call.1} parent=1 // pred_check
      _
    $region15: #{tpu_custom_call.1} parent=1 // pred_check_branch
      %48 = sbr.rel (0) target = $region17
    $region16: #{tpu_custom_call.1} parent=1 // pred_region
      _
    $region17: #{tpu_custom_call.1} parent=1 // pred_fallthru
      _
    // Predicated region
    $region18: #{tpu_custom_call.1} parent=1 // pred_check
      _
    $region19: #{tpu_custom_call.1} parent=1 // pred_check_branch
      %50 = sbr.rel (0) target = $region21
    $region20: #{tpu_custom_call.1} parent=1 // pred_region
      %s52 = ssub.s32 1024, 1024
      %53 = vsyncadd [#allocation9], %s52
      %s54 = sshll.u32 [#allocation10], 4
      %s55 = int_to_ptr.vmem [resolvable:$true] %s54
      %60 = dma.hbm_to_vmem [thread:$0]  %s4, 1024, %s55, [#allocation9], 64, 64, 4
    $region21: #{tpu_custom_call.1} parent=1 // pred_fallthru
      _
    // Predicated region
    $region22: #{tpu_custom_call.1} parent=1 // pred_check
      _
    $region23: #{tpu_custom_call.1} parent=1 // pred_check_branch
      %62 = sbr.rel (0) target = $region25
    $region24: #{tpu_custom_call.1} parent=1 // pred_region
      _
    $region25: #{tpu_custom_call.1} parent=1 // pred_fallthru
      _
    // Predicated region
    $region26: #{tpu_custom_call.1} parent=1 // pred_check
      _
    $region27: #{tpu_custom_call.1} parent=1 // pred_check_branch
      %64 = sbr.rel (0) target = $region29
    $region28: #{tpu_custom_call.1} parent=1 // pred_region
      %65 = dma.done [#allocation6], 16
    $region29: #{tpu_custom_call.1} parent=1 // pred_fallthru
      _
    // Predicated region
    $region30: #{tpu_custom_call.1} parent=1 // pred_check
      _
    $region31: #{tpu_custom_call.1} parent=1 // pred_check_branch
      %67 = sbr.rel (0) target = $region33
    $region32: #{tpu_custom_call.1} parent=1 // pred_region
      %68 = dma.done [#allocation4], 896
    $region33: #{tpu_custom_call.1} parent=1 // pred_fallthru
      _
    // Predicated region
    $region34: #{tpu_custom_call.1} parent=1 // pred_check
      _
    $region35: #{tpu_custom_call.1} parent=1 // pred_check_branch
      %70 = sbr.rel (0) target = $region37
    $region36: #{tpu_custom_call.1} parent=1 // pred_region
      %71 = dma.done [#allocation9], 1024
    $region37: #{tpu_custom_call.1} parent=1 // pred_fallthru
      _
    // Predicated region
    $region38: #{tpu_custom_call.1} parent=1 // pred_check
      _
    $region39: #{tpu_custom_call.1} parent=1 // pred_check_branch
      %73 = sbr.rel (0) target = $region41
    $region40: #{tpu_custom_call.1} parent=1 // pred_region
      %74 = dma.done [#allocation9], 1024
    $region41: #{tpu_custom_call.1} parent=1 // pred_fallthru
      _
    %75 = sfence
    %s77 = sld [smem:[#allocation3]]
    %p78 = scmp.gt.s32.totalorder %s77, 0
    %s79 = scalar_select %p78, %s77, 0
    %p80 = scmp.lt.s32.totalorder %s79, 49
    %s81 = scalar_select %p80, %s79, 49
    %s82 = scalar_lea.vmem [#allocation7], %s81
    %v83 = vld [vmem:[%s82] sm:$0x1]
    %84 = vst [vmem:[#allocation2] sm:$0x1] %v83
    %s85 = sld [smem:[#allocation3 + $0x1]]
    %p86 = scmp.gt.s32.totalorder %s85, 0
    %s87 = scalar_select %p86, %s85, 0
    %p88 = scmp.lt.s32.totalorder %s87, 49
    %s89 = scalar_select %p88, %s87, 49
    %s90 = scalar_lea.vmem [#allocation7], %s89
    %v91 = vld [vmem:[%s90] sm:$0x1]
    %92 = vst [vmem:[#allocation2 + $0x1] sm:$0x1] %v91
    %s93 = sld [smem:[#allocation3 + $0x2]]
    %p94 = scmp.gt.s32.totalorder %s93, 0
    %s95 = scalar_select %p94, %s93, 0
    %p96 = scmp.lt.s32.totalorder %s95, 49
    %s97 = scalar_select %p96, %s95, 49
    %s98 = scalar_lea.vmem [#allocation7], %s97
    %v99 = vld [vmem:[%s98] sm:$0x1]
    %100 = vst [vmem:[#allocation2 + $0x2] sm:$0x1] %v99
    %s101 = sld [smem:[#allocation3 + $0x3]]
    %p102 = scmp.gt.s32.totalorder %s101, 0
    %s103 = scalar_select %p102, %s101, 0
    %p104 = scmp.lt.s32.totalorder %s103, 49
    %s105 = scalar_select %p104, %s103, 49
    %s106 = scalar_lea.vmem [#allocation7], %s105
    %v107 = vld [vmem:[%s106] sm:$0x1]
    %108 = vst [vmem:[#allocation2 + $0x3] sm:$0x1] %v107
    %s109 = sld [smem:[#allocation3 + $0x4]]
    %p110 = scmp.gt.s32.totalorder %s109, 0
    %s111 = scalar_select %p110, %s109, 0
    %p112 = scmp.lt.s32.totalorder %s111, 49
    %s113 = scalar_select %p112, %s111, 49
    %s114 = scalar_lea.vmem [#allocation7], %s113
    %v115 = vld [vmem:[%s114] sm:$0x1]
    %116 = vst [vmem:[#allocation2 + $0x4] sm:$0x1] %v115
    %s117 = sld [smem:[#allocation3 + $0x5]]
    %p118 = scmp.gt.s32.totalorder %s117, 0
    %s119 = scalar_select %p118, %s117, 0
    %p120 = scmp.lt.s32.totalorder %s119, 49
    %s121 = scalar_select %p120, %s119, 49
    %s122 = scalar_lea.vmem [#allocation7], %s121
    %v123 = vld [vmem:[%s122] sm:$0x1]
    %124 = vst [vmem:[#allocation2 + $0x5] sm:$0x1] %v123
    %s125 = sld [smem:[#allocation3 + $0x6]]
    %p126 = scmp.gt.s32.totalorder %s125, 0
    %s127 = scalar_select %p126, %s125, 0
    %p128 = scmp.lt.s32.totalorder %s127, 49
    %s129 = scalar_select %p128, %s127, 49
    %s130 = scalar_lea.vmem [#allocation7], %s129
    %v131 = vld [vmem:[%s130] sm:$0x1]
    %132 = vst [vmem:[#allocation2 + $0x6] sm:$0x1] %v131
    %s133 = sld [smem:[#allocation3 + $0x7]]
    %p134 = scmp.gt.s32.totalorder %s133, 0
    %s135 = scalar_select %p134, %s133, 0
    %p136 = scmp.lt.s32.totalorder %s135, 49
    %s137 = scalar_select %p136, %s135, 49
    %s138 = scalar_lea.vmem [#allocation7], %s137
    %v139 = vld [vmem:[%s138] sm:$0x1]
    %140 = vst [vmem:[#allocation2 + $0x7] sm:$0x1] %v139
    %v141 = vld [vmem:[#allocation2] sm:$0xff]
    %v142 = vpack.c.bf16 %v141, %v141
    %v143 = vld [vmem:[#allocation8] sm:$0xf]
    %v144 = vld [vmem:[#allocation8 + $0x4] sm:$0xf]
    %v145 = vld [vmem:[#allocation8 + $0x8] sm:$0xf]
    %v146 = vld [vmem:[#allocation8 + $0xc] sm:$0xf]
    %v147 = vld [vmem:[#allocation8 + $0x10] sm:$0xf]
    %v148 = vld [vmem:[#allocation8 + $0x14] sm:$0xf]
    %v149 = vld [vmem:[#allocation8 + $0x18] sm:$0xf]
    %v150 = vld [vmem:[#allocation8 + $0x1c] sm:$0xf]
    %v151 = vld [vmem:[#allocation8 + $0x20] sm:$0xf]
    %v152 = vld [vmem:[#allocation8 + $0x24] sm:$0xf]
    %v153 = vld [vmem:[#allocation8 + $0x28] sm:$0xf]
    %v154 = vld [vmem:[#allocation8 + $0x2c] sm:$0xf]
    %v155 = vld [vmem:[#allocation8 + $0x30] sm:$0xf]
    %v156 = vld [vmem:[#allocation8 + $0x34] sm:$0xf]
    %v157 = vld [vmem:[#allocation8 + $0x38] sm:$0xf]
    %v158 = vld [vmem:[#allocation8 + $0x3c] sm:$0xf]
    %v159 = vld [vmem:[%s3] sm:$0x1]
    %v161 = vlaneseq
    %v162 = vshrl.u32 %v161, 7
    %v163 = vsub.s32 0, %v162
    %v164 = vrot.slane %v159, %v163
    %v182 = vunpack.c.l.b16 %v143
    %v183 = vunpack.c.l.b16 %v144
    %v184 = vunpack.c.l.b16 %v145
    %v185 = vunpack.c.l.b16 %v146
    %v186 = vunpack.c.l.b16 %v147
    %v187 = vunpack.c.l.b16 %v148
    %v188 = vunpack.c.l.b16 %v149
    %v189 = vunpack.c.l.b16 %v150
    %v190 = vunpack.c.l.b16 %v151
    %v191 = vunpack.c.l.b16 %v152
    %v192 = vunpack.c.l.b16 %v153
    %v193 = vunpack.c.l.b16 %v154
    %v194 = vunpack.c.l.b16 %v155
    %v195 = vunpack.c.l.b16 %v156
    %v196 = vunpack.c.l.b16 %v157
    %v197 = vunpack.c.l.b16 %v158
    %v198 = vpack.c.b16 %v183, %v182
    %v199 = vpack.c.b16 %v185, %v184
    %v200 = vpack.c.b16 %v187, %v186
    %v201 = vpack.c.b16 %v189, %v188
    %v202 = vpack.c.b16 %v191, %v190
    %v203 = vpack.c.b16 %v193, %v192
    %v204 = vpack.c.b16 %v195, %v194
    %v205 = vpack.c.b16 %v197, %v196
    %214 = vmatprep.subr.bf16.mxu0 0
    %215 = vmatpush1.bf16.msra.mxu0 %v198
    %216 = vmatprep.subr.bf16.mxu0 0
    %217 = vmatpush1.bf16.msra.mxu0 %v199
    %218 = vmatprep.subr.bf16.mxu0 0
    %219 = vmatpush1.bf16.msra.mxu0 %v200
    %220 = vmatprep.subr.bf16.mxu0 0
    %221 = vmatpush1.bf16.msra.mxu0 %v201
    %222 = vmatprep.subr.bf16.mxu0 0
    %223 = vmatpush1.bf16.msra.mxu0 %v202
    %224 = vmatprep.subr.bf16.mxu0 0
    %225 = vmatpush1.bf16.msra.mxu0 %v203
    %226 = vmatprep.subr.bf16.mxu0 0
    %227 = vmatpush1.bf16.msra.mxu0 %v204
    %228 = vmatprep.subr.bf16.mxu0 0
    %229 = vmatpush1.bf16.msra.mxu0 %v205
    %230 = vmatprep.subr.bf16.mxu0 0
    %231 = vmatpush1.bf16.msra.mxu0 0
    %232 = vmatprep.subr.bf16.mxu0 0
    %233 = vmatpush1.bf16.msra.mxu0 0
    %234 = vmatprep.subr.bf16.mxu0 0
    %235 = vmatpush1.bf16.msra.mxu0 0
    %236 = vmatprep.subr.bf16.mxu0 0
    %237 = vmatpush1.bf16.msra.mxu0 0
    %238 = vmatprep.subr.bf16.mxu0 0
    %239 = vmatpush1.bf16.msra.mxu0 0
    %240 = vmatprep.subr.bf16.mxu0 0
    %241 = vmatpush1.bf16.msra.mxu0 0
    %242 = vmatprep.subr.bf16.mxu0 0
    %243 = vmatpush1.bf16.msra.mxu0 0
    %244 = vmatprep.subr.bf16.mxu0 0
    %245 = vmatpush1.bf16.msra.mxu0 0
    %246 = vmatprep.mubr.bf16.mxu0 0
    %247 = vmatmul.mubr.bf16.gmra.mrb[0].mxu0 %v142
    %v248 = vpop.f32.mrb[0].mxu0
    %v249 = vadd.f32 %v164, %v248
    %v250 = vpop.f32.mrb[0].mxu0
    %v251 = vpop.f32.mrb[0].mxu0
    %v252 = vpop.f32.mrb[0].mxu0
    %253 = vdwg.mxu0
    %v254 = vxor.u32 %v249, 2147483648
    %v255 = vmul.f32 %v254, 1.442695
    %v256 = vpow.pop %v255
    %v257 = vadd.f32 %v256, 1.0
    %v258 = vrcp.pop %v257
    %v259 = vmul.f32 1.0, %v258
    %v260 = vmul.f32 %v249, %v259
    %v261 = vpack.c.bf16 %v260, %v260
    %v262 = vld [vmem:[#allocation10] sm:$0xf]
    %v263 = vld [vmem:[#allocation10 + $0x4] sm:$0xf]
    %v264 = vld [vmem:[#allocation10 + $0x8] sm:$0xf]
    %v265 = vld [vmem:[#allocation10 + $0xc] sm:$0xf]
    %v266 = vld [vmem:[#allocation10 + $0x10] sm:$0xf]
    %v267 = vld [vmem:[#allocation10 + $0x14] sm:$0xf]
    %v268 = vld [vmem:[#allocation10 + $0x18] sm:$0xf]
    %v269 = vld [vmem:[#allocation10 + $0x1c] sm:$0xf]
    %v270 = vld [vmem:[#allocation10 + $0x20] sm:$0xf]
    %v271 = vld [vmem:[#allocation10 + $0x24] sm:$0xf]
    %v272 = vld [vmem:[#allocation10 + $0x28] sm:$0xf]
    %v273 = vld [vmem:[#allocation10 + $0x2c] sm:$0xf]
    %v274 = vld [vmem:[#allocation10 + $0x30] sm:$0xf]
    %v275 = vld [vmem:[#allocation10 + $0x34] sm:$0xf]
    %v276 = vld [vmem:[#allocation10 + $0x38] sm:$0xf]
    %v277 = vld [vmem:[#allocation10 + $0x3c] sm:$0xf]
    %v278 = vld [vmem:[%s5] sm:$0x1]
    %v280 = vlaneseq
    %v281 = vshrl.u32 %v280, 7
    %v282 = vsub.s32 0, %v281
    %v283 = vrot.slane %v278, %v282
    %v301 = vunpack.c.l.b16 %v262
    %v302 = vunpack.c.l.b16 %v263
    %v303 = vunpack.c.l.b16 %v264
    %v304 = vunpack.c.l.b16 %v265
    %v305 = vunpack.c.l.b16 %v266
    %v306 = vunpack.c.l.b16 %v267
    %v307 = vunpack.c.l.b16 %v268
    %v308 = vunpack.c.l.b16 %v269
    %v309 = vunpack.c.l.b16 %v270
    %v310 = vunpack.c.l.b16 %v271
    %v311 = vunpack.c.l.b16 %v272
    %v312 = vunpack.c.l.b16 %v273
    %v313 = vunpack.c.l.b16 %v274
    %v314 = vunpack.c.l.b16 %v275
    %v315 = vunpack.c.l.b16 %v276
    %v316 = vunpack.c.l.b16 %v277
    %v317 = vpack.c.b16 %v302, %v301
    %v318 = vpack.c.b16 %v304, %v303
    %v319 = vpack.c.b16 %v306, %v305
    %v320 = vpack.c.b16 %v308, %v307
    %v321 = vpack.c.b16 %v310, %v309
    %v322 = vpack.c.b16 %v312, %v311
    %v323 = vpack.c.b16 %v314, %v313
    %v324 = vpack.c.b16 %v316, %v315
    %333 = vmatprep.subr.bf16.mxu0 0
    %334 = vmatpush1.bf16.msra.mxu0 %v317
    %335 = vmatprep.subr.bf16.mxu0 0
    %336 = vmatpush1.bf16.msra.mxu0 %v318
    %337 = vmatprep.subr.bf16.mxu0 0
    %338 = vmatpush1.bf16.msra.mxu0 %v319
    %339 = vmatprep.subr.bf16.mxu0 0
    %340 = vmatpush1.bf16.msra.mxu0 %v320
    %341 = vmatprep.subr.bf16.mxu0 0
    %342 = vmatpush1.bf16.msra.mxu0 %v321
    %343 = vmatprep.subr.bf16.mxu0 0
    %344 = vmatpush1.bf16.msra.mxu0 %v322
    %345 = vmatprep.subr.bf16.mxu0 0
    %346 = vmatpush1.bf16.msra.mxu0 %v323
    %347 = vmatprep.subr.bf16.mxu0 0
    %348 = vmatpush1.bf16.msra.mxu0 %v324
    %349 = vmatprep.subr.bf16.mxu0 0
    %350 = vmatpush1.bf16.msra.mxu0 0
    %351 = vmatprep.subr.bf16.mxu0 0
    %352 = vmatpush1.bf16.msra.mxu0 0
    %353 = vmatprep.subr.bf16.mxu0 0
    %354 = vmatpush1.bf16.msra.mxu0 0
    %355 = vmatprep.subr.bf16.mxu0 0
    %356 = vmatpush1.bf16.msra.mxu0 0
    %357 = vmatprep.subr.bf16.mxu0 0
    %358 = vmatpush1.bf16.msra.mxu0 0
    %359 = vmatprep.subr.bf16.mxu0 0
    %360 = vmatpush1.bf16.msra.mxu0 0
    %361 = vmatprep.subr.bf16.mxu0 0
    %362 = vmatpush1.bf16.msra.mxu0 0
    %363 = vmatprep.subr.bf16.mxu0 0
    %364 = vmatpush1.bf16.msra.mxu0 0
    %365 = vmatprep.mubr.bf16.mxu0 0
    %366 = vmatmul.mubr.bf16.gmra.mrb[0].mxu0 %v261
    %v367 = vpop.f32.mrb[0].mxu0
    %v368 = vadd.f32 %v283, %v367
    %v369 = vpop.f32.mrb[0].mxu0
    %v370 = vpop.f32.mrb[0].mxu0
    %v371 = vpop.f32.mrb[0].mxu0
    %372 = vdwg.mxu0
    %v373 = vxor.u32 %v368, 2147483648
    %v374 = vmul.f32 %v373, 1.442695
    %v375 = vpow.pop %v374
    %v376 = vadd.f32 %v375, 1.0
    %v377 = vrcp.pop %v376
    %v378 = vmul.f32 1.0, %v377
    %v379 = vmul.f32 %v368, %v378
    %380 = vst [vmem:[#allocation11] sm:$0xff] %v379
    // Predicated region
    $region42: #{tpu_custom_call.1} parent=1 // pred_check
      _
    $region43: #{tpu_custom_call.1} parent=1 // pred_check_branch
      %382 = sbr.rel (0) target = $region45
    $region44: #{tpu_custom_call.1} parent=1 // pred_region
      %s384 = ssub.s32 128, 128
      %385 = vsyncadd [#allocation5], %s384
      %s387 = sshll.u32 [#allocation11], 4
      %s388 = int_to_ptr.vmem [resolvable:$true] %s387
      %390 = dma.vmem_to_hbm [thread:$0]  %s388, 128, %s6, [#allocation5]
    $region45: #{tpu_custom_call.1} parent=1 // pred_fallthru
      _
    // Predicated region
    $region46: #{tpu_custom_call.1} parent=1 // pred_check
      _
    $region47: #{tpu_custom_call.1} parent=1 // pred_check_branch
      %392 = sbr.rel (0) target = $region49
    $region48: #{tpu_custom_call.1} parent=1 // pred_region
      %393 = dma.done [#allocation5], 128
    $region49: #{tpu_custom_call.1} parent=1 // pred_fallthru
      _
    %394 = vsyncpa [#allocation4], 1
    %395 = vsyncpa [#allocation9], 1
    %396 = vsyncpa [#allocation5], 1
    %397 = vsyncpa [#allocation6], 1

</llo_original>
